<compile_context>
chip_gen: v5e
topology: v5e:2x2
jax: 0.10.0
libtpu: 0.0.40
codegen_flags: <defaults>
</compile_context>

<pallas_src>
import functools

import jax
import jax.numpy as jnp
from jax import lax
from jax.experimental import pallas as pl
from jax.experimental.pallas import tpu as pltpu


def _initial_block_kernel(*refs, Cin, Cmain, TR, Wo, has_halo):
    """One (batch, row-tile) output block.

    refs (has_halo=True):  x_ref, halo_ref, w_ref, p_ref, o_ref
    refs (has_halo=False): x_ref,           w_ref, p_ref, o_ref

    x_ref:    (1, 4*Cin, TR(+1), Wo+1) parity-split padded planes,
              plane index = (row_parity*2 + col_parity)*Cin + ci.
    halo_ref: (1, 2*Cin, 8, Wo+1) p=0 planes, rows starting at (t+1)*TR
              (only row 0 of the 8-row block is read).
    w_ref:    (Cmain*TR, 28*TR) bf16 block-diagonal folded conv weights
              (BN scale folded into taps, bias*scale+shift in the last block).
    p_ref:    (2*Cin+1,) f32 SMEM: [ext scale | ext shift | PReLU alpha].
    o_ref:    (1, Cmain+Cin, TR, Wo) NCHW output block.
    """
    if has_halo:
        x_ref, halo_ref, w_ref, p_ref, o_ref = refs
    else:
        x_ref, w_ref, p_ref, o_ref = refs

    alpha = p_ref[2 * Cin]

    # Row-shifted (output row r -> plane row r+1) views of the p=0 planes.
    shifted = []
    for pi in range(2 * Cin):
        if has_halo:
            top = x_ref[0, pi, 1:TR, :]          # rows 1 .. TR-1 of this tile
            bot = halo_ref[0, pi, 0:1, :]        # row TR (first row of next tile)
            shifted.append(jnp.concatenate([top, bot], axis=0))
        else:
            shifted.append(x_ref[0, pi, 1:TR + 1, :])

    # ---- main branch: 3x3 conv, stride 2, pad 1, + bias + BN, on the MXU ----
    pieces = []
    for ci in range(Cin):
        for kh in range(3):
            p, a0 = kh % 2, kh // 2
            for kw in range(3):
                q, b0 = kw % 2, kw // 2
                pi = (p * 2 + q) * Cin + ci
                if a0 == 0:
                    pieces.append(x_ref[0, pi, 0:TR, b0:b0 + Wo])
                else:                            # p == 0, uses the halo row
                    pieces.append(shifted[pi][:, b0:b0 + Wo])
    pieces.append(jnp.ones((TR, Wo), dtype=pieces[0].dtype))   # bias rows
    rhs = jnp.concatenate(pieces, axis=0).astype(jnp.bfloat16)  # (28*TR, Wo)

    acc = jnp.dot(w_ref[...], rhs,
                  preferred_element_type=jnp.float32)           # (Cmain*TR, Wo)
    main = jnp.where(acc >= 0, acc, alpha * acc)
    o_ref[0, 0:Cmain, :, :] = main.reshape(Cmain, TR, Wo).astype(o_ref.dtype)

    # ---- ext branch: 2x2/stride-2 max pool + BN affine + PReLU (VPU) ----
    for ci in range(Cin):
        t00 = x_ref[0, 3 * Cin + ci, 0:TR, 0:Wo]       # plane (1,1)[r,   c]
        t01 = x_ref[0, 2 * Cin + ci, 0:TR, 1:Wo + 1]   # plane (1,0)[r,   c+1]
        t10 = shifted[Cin + ci][:, 0:Wo]               # plane (0,1)[r+1, c]
        t11 = shifted[ci][:, 1:Wo + 1]                 # plane (0,0)[r+1, c+1]
        pooled = jnp.maximum(jnp.maximum(t00, t01), jnp.maximum(t10, t11))
        e = pooled.astype(jnp.float32) * p_ref[ci] + p_ref[Cin + ci]
        e = jnp.where(e >= 0, e, alpha * e)
        o_ref[0, Cmain + ci, :, :] = e.astype(o_ref.dtype)


def _build_weight_matrix(w_oihw, bias, scale_main, shift_main, TR):
    """Block-diagonal folded weights: W[c*TR+r, k*TR+r] = wfold[c,k] (k<27),
    and the k=27 block carries bias*scale+shift."""
    Cmain, Cin = w_oihw.shape[0], w_oihw.shape[1]
    wf = (w_oihw.astype(jnp.float32)
          * scale_main[:, None, None, None]).reshape(Cmain, Cin * 9)
    bf = bias.astype(jnp.float32) * scale_main + shift_main
    wcat = jnp.concatenate([wf, bf[:, None]], axis=1)        # (Cmain, Cin*9+1)
    eye = jnp.eye(TR, dtype=jnp.float32)
    wbig = wcat[:, None, :, None] * eye[None, :, None, :]    # (Cmain,TR,K,TR)
    K = Cin * 9 + 1
    return wbig.reshape(Cmain * TR, K * TR).astype(jnp.bfloat16)


def initial_block_forward(x_nchw, params, row_tile=None):
    N, Cin, H, W = x_nchw.shape
    w_oihw = params["w_oihw"]                  # (Cmain, Cin, 3, 3)
    Cmain = w_oihw.shape[0]
    Cout = params["bn_scale"].shape[0]
    assert Cout == Cmain + Cin, "MaxPool branch keeps Cin channels"
    assert H % 2 == 0 and W % 2 == 0, "kernel assumes even H, W"
    Ho, Wo = H // 2, W // 2
    A, B = Ho + 1, Wo + 1

    # Row-tile choice: small TR bounds MXU redundancy (TRx) and per-step VMEM,
    # and gives many parallel grid steps (v7x has 2 TensorCores).
    if row_tile is not None:
        TR = int(row_tile)
    elif Ho % 8 == 0:
        TR = 16 if (Ho % 16 == 0 and Ho >= 32) else 8
    else:
        TR = Ho                                  # full-rows fallback
    assert Ho % TR == 0, (Ho, TR)
    n_t = Ho // TR
    has_halo = (TR % 8 == 0)
    if not has_halo:
        assert n_t == 1, "row tiling requires TR % 8 == 0"

    # ---- host-side scalar prep (eval-mode BN folded into the weights) ----
    scale = params["bn_scale"].astype(jnp.float32)
    shift = params["bn_shift"].astype(jnp.float32)
    wmat = _build_weight_matrix(w_oihw, params["bias"],
                                scale[:Cmain], shift[:Cmain], TR)
    pvec = jnp.concatenate([scale[Cmain:], shift[Cmain:],
                            jnp.reshape(params["alpha"], (1,)).astype(jnp.float32)])

    # ---- host-side input prep: zero-pad 1 + parity split (one fused pass) ----
    # (No halo-row duplication gather any more; the halo row is fetched
    #  in-kernel through a second tiny BlockSpec on this same array.)
    x_pad = jnp.pad(x_nchw, ((0, 0), (0, 0), (1, 1), (1, 1)))
    planes = x_pad.reshape(N, Cin, A, 2, B, 2).transpose(0, 3, 5, 1, 2, 4)
    planes = planes.reshape(N, 4 * Cin, A, B)    # plane = (p*2+q)*Cin + ci

    kernel = functools.partial(_initial_block_kernel, Cin=Cin, Cmain=Cmain,
                               TR=TR, Wo=Wo, has_halo=has_halo)

    x_block_rows = TR if has_halo else A
    in_specs = [pl.BlockSpec((1, 4 * Cin, x_block_rows, B),
                             lambda n, t: (n, 0, t, 0))]
    operands = [planes]
    if has_halo:
        r8 = TR // 8
        in_specs.append(pl.BlockSpec((1, 2 * Cin, 8, B),
                                     lambda n, t: (n, 0, (t + 1) * r8, 0)))
        operands.append(planes)
    K = Cin * 9 + 1
    in_specs.append(pl.BlockSpec((Cmain * TR, K * TR), lambda n, t: (0, 0)))
    in_specs.append(pl.BlockSpec(memory_space=pltpu.MemorySpace.SMEM))
    operands += [wmat, pvec]

    out_spec = pl.BlockSpec((1, Cout, TR, Wo), lambda n, t: (n, 0, t, 0))

    # VMEM budget derived from the actual block bytes (not hard-coded).
    esize = jnp.dtype(x_nchw.dtype).itemsize
    xb = 4 * Cin * x_block_rows * B * esize
    hb = (2 * Cin * 8 * B * esize) if has_halo else 0
    ob = Cout * TR * Wo * esize
    wb = Cmain * TR * K * TR * 2
    scratch = K * TR * Wo * (esize + 2) + 2 * Cmain * TR * Wo * 4
    vmem_limit = int(2 * (xb + hb + ob) + wb + 2 * scratch) + (8 << 20)
    vmem_limit = min(max(vmem_limit, 16 << 20), 96 << 20)

    out = pl.pallas_call(
        kernel,
        out_shape=jax.ShapeDtypeStruct((N, Cout, Ho, Wo), x_nchw.dtype),
        grid=(N, n_t),
        in_specs=in_specs,
        out_specs=out_spec,
        compiler_params=pltpu.CompilerParams(
            dimension_semantics=("parallel", "parallel"),
            vmem_limit_bytes=vmem_limit),
    )(*operands)
    return out                                    # NCHW, no post-transpose


def init_params(key, in_channels, out_channels):
    Cmain = out_channels - 3
    k = jax.random.split(key, 6)
    w_oihw = 0.1 * jax.random.normal(k[0], (Cmain, in_channels, 3, 3),
                                     jnp.float32)
    bias = 0.05 * jax.random.normal(k[1], (Cmain,), jnp.float32)
    gamma = 1.0 + 0.1 * jax.random.normal(k[2], (out_channels,), jnp.float32)
    beta = 0.1 * jax.random.normal(k[3], (out_channels,), jnp.float32)
    running_mean = 0.1 * jax.random.normal(k[4], (out_channels,), jnp.float32)
    running_var = jax.random.uniform(k[5], (out_channels,), jnp.float32,
                                     0.5, 1.5)
    eps = 1e-3   # BatchNorm2d(out_channels, 0.001, ...)
    scale = gamma / jnp.sqrt(running_var + eps)
    shift = beta - running_mean * scale
    alpha = jnp.float32(0.25)   # nn.PReLU() default slope
    return {"w_oihw": w_oihw, "bias": bias,
            "bn_scale": scale, "bn_shift": shift, "alpha": alpha}


def reference(x_nchw, params):
    """Pure-JAX reference of the same forward pass (eval-mode BN)."""
    w = params["w_oihw"]
    b = params["bias"]
    main = lax.conv_general_dilated(x_nchw, w, (2, 2), ((1, 1), (1, 1)),
                                    dimension_numbers=("NCHW", "OIHW", "NCHW"))
    main = main + b[None, :, None, None]
    ext = lax.reduce_window(x_nchw, -jnp.inf, lax.max, (1, 1, 2, 2),
                            (1, 1, 2, 2), "VALID")
    out = jnp.concatenate([main, ext], axis=1)
    out = (out * params["bn_scale"][None, :, None, None]
           + params["bn_shift"][None, :, None, None])
    a = params["alpha"]
    return jnp.where(out >= 0, out, a * out)


if __name__ == "__main__":
    key = jax.random.PRNGKey(0)
    kx, kp = jax.random.split(key)
    N, Cin, H, W = 2, 3, 16, 16       # Cin must be 3 (concat semantics)
    out_channels = 8
    x = jax.random.normal(kx, (N, Cin, H, W), jnp.float32)
    params = init_params(kp, Cin, out_channels)

    # MXU path uses bf16 operands with f32 accumulation -> relaxed tolerance.
    TOL = 5e-2

    out = jax.block_until_ready(initial_block_forward(x, params))
    ref = reference(x, params)
    assert out.shape == (N, out_channels, H // 2, W // 2), out.shape
    err = float(jnp.max(jnp.abs(out - ref)))
    assert err < TOL, err

    # Multi-row-tile path (grid t-axis > 1, in-kernel halo-row fetch).
    x2 = jax.random.normal(jax.random.fold_in(kx, 1), (1, Cin, 32, 32),
                           jnp.float32)
    out2 = jax.block_until_ready(initial_block_forward(x2, params, row_tile=8))
    ref2 = reference(x2, params)
    err2 = float(jnp.max(jnp.abs(out2 - ref2)))
    assert err2 < TOL, err2

    # Full-rows fallback (Ho % 8 != 0) with a non-128-aligned Wo.
    x3 = jax.random.normal(jax.random.fold_in(kx, 2), (1, Cin, 12, 20),
                           jnp.float32)
    out3 = jax.block_until_ready(initial_block_forward(x3, params))
    ref3 = reference(x3, params)
    err3 = float(jnp.max(jnp.abs(out3 - ref3)))
    assert err3 < TOL, err3

    print("KERNEL_OK")
</pallas_src>

<mosaic_0001>
module attributes {stable_mosaic.version = 11 : i64} {
  func.func @_initial_block_kernel(%arg0: i32, %arg1: i32, %arg2: memref<1x12x8x9xf32, #tpu.memory_space<vmem>>, %arg3: memref<1x6x8x9xf32, #tpu.memory_space<vmem>>, %arg4: memref<40x224xbf16, #tpu.memory_space<vmem>>, %arg5: memref<7xf32, #tpu.memory_space<smem>>, %arg6: memref<1x8x8x8xf32, #tpu.memory_space<vmem>>) attributes {dimension_semantics = [#tpu.dimension_semantics<parallel>, #tpu.dimension_semantics<parallel>], iteration_bounds = array<i64: 2, 1>, scalar_prefetch = 0 : i64, scratch_operands = 0 : i64, tpu.core_type = #tpu.core_type<tc>, window_params = [{transform_indices = @transform_0, window_bounds = array<i64: 1, 12, 8, 9>}, {transform_indices = @transform_1, window_bounds = array<i64: 1, 6, 8, 9>}, {pipeline_mode = #tpu.pipeline_mode<synchronous>, transform_indices = @transform_2, window_bounds = array<i64: 40, 224>}, {transform_indices = @transform_3, window_bounds = array<i64: 7>}, {transform_indices = @transform_4, window_bounds = array<i64: 1, 8, 8, 8>}]} {
    %c6 = arith.constant 6 : index
    %0 = memref.load %arg5[%c6] : memref<7xf32, #tpu.memory_space<smem>>
    %c0 = arith.constant 0 : index
    %c0_0 = arith.constant 0 : index
    %c1 = arith.constant 1 : index
    %c0_1 = arith.constant 0 : index
    %1 = vector.load %arg2[%c0, %c0_0, %c1, %c0_1] : memref<1x12x8x9xf32, #tpu.memory_space<vmem>>, vector<1x1x7x9xf32>
    %2 = vector.shape_cast %1 : vector<1x1x7x9xf32> to vector<7x9xf32>
    %c0_2 = arith.constant 0 : index
    %c0_3 = arith.constant 0 : index
    %c0_4 = arith.constant 0 : index
    %c0_5 = arith.constant 0 : index
    %3 = vector.load %arg3[%c0_2, %c0_3, %c0_4, %c0_5] : memref<1x6x8x9xf32, #tpu.memory_space<vmem>>, vector<1x1x1x9xf32>
    %4 = vector.shape_cast %3 : vector<1x1x1x9xf32> to vector<1x9xf32>
    %5 = tpu.concatenate %2, %4 in 0 : vector<7x9xf32>, vector<1x9xf32> -> vector<8x9xf32>
    %c0_6 = arith.constant 0 : index
    %c1_7 = arith.constant 1 : index
    %c1_8 = arith.constant 1 : index
    %c0_9 = arith.constant 0 : index
    %6 = vector.load %arg2[%c0_6, %c1_7, %c1_8, %c0_9] : memref<1x12x8x9xf32, #tpu.memory_space<vmem>>, vector<1x1x7x9xf32>
    %7 = vector.shape_cast %6 : vector<1x1x7x9xf32> to vector<7x9xf32>
    %c0_10 = arith.constant 0 : index
    %c1_11 = arith.constant 1 : index
    %c0_12 = arith.constant 0 : index
    %c0_13 = arith.constant 0 : index
    %8 = vector.load %arg3[%c0_10, %c1_11, %c0_12, %c0_13] : memref<1x6x8x9xf32, #tpu.memory_space<vmem>>, vector<1x1x1x9xf32>
    %9 = vector.shape_cast %8 : vector<1x1x1x9xf32> to vector<1x9xf32>
    %10 = tpu.concatenate %7, %9 in 0 : vector<7x9xf32>, vector<1x9xf32> -> vector<8x9xf32>
    %c0_14 = arith.constant 0 : index
    %c2 = arith.constant 2 : index
    %c1_15 = arith.constant 1 : index
    %c0_16 = arith.constant 0 : index
    %11 = vector.load %arg2[%c0_14, %c2, %c1_15, %c0_16] : memref<1x12x8x9xf32, #tpu.memory_space<vmem>>, vector<1x1x7x9xf32>
    %12 = vector.shape_cast %11 : vector<1x1x7x9xf32> to vector<7x9xf32>
    %c0_17 = arith.constant 0 : index
    %c2_18 = arith.constant 2 : index
    %c0_19 = arith.constant 0 : index
    %c0_20 = arith.constant 0 : index
    %13 = vector.load %arg3[%c0_17, %c2_18, %c0_19, %c0_20] : memref<1x6x8x9xf32, #tpu.memory_space<vmem>>, vector<1x1x1x9xf32>
    %14 = vector.shape_cast %13 : vector<1x1x1x9xf32> to vector<1x9xf32>
    %15 = tpu.concatenate %12, %14 in 0 : vector<7x9xf32>, vector<1x9xf32> -> vector<8x9xf32>
    %c0_21 = arith.constant 0 : index
    %c3 = arith.constant 3 : index
    %c1_22 = arith.constant 1 : index
    %c0_23 = arith.constant 0 : index
    %16 = vector.load %arg2[%c0_21, %c3, %c1_22, %c0_23] : memref<1x12x8x9xf32, #tpu.memory_space<vmem>>, vector<1x1x7x9xf32>
    %17 = vector.shape_cast %16 : vector<1x1x7x9xf32> to vector<7x9xf32>
    %c0_24 = arith.constant 0 : index
    %c3_25 = arith.constant 3 : index
    %c0_26 = arith.constant 0 : index
    %c0_27 = arith.constant 0 : index
    %18 = vector.load %arg3[%c0_24, %c3_25, %c0_26, %c0_27] : memref<1x6x8x9xf32, #tpu.memory_space<vmem>>, vector<1x1x1x9xf32>
    %19 = vector.shape_cast %18 : vector<1x1x1x9xf32> to vector<1x9xf32>
    %20 = tpu.concatenate %17, %19 in 0 : vector<7x9xf32>, vector<1x9xf32> -> vector<8x9xf32>
    %c0_28 = arith.constant 0 : index
    %c4 = arith.constant 4 : index
    %c1_29 = arith.constant 1 : index
    %c0_30 = arith.constant 0 : index
    %21 = vector.load %arg2[%c0_28, %c4, %c1_29, %c0_30] : memref<1x12x8x9xf32, #tpu.memory_space<vmem>>, vector<1x1x7x9xf32>
    %22 = vector.shape_cast %21 : vector<1x1x7x9xf32> to vector<7x9xf32>
    %c0_31 = arith.constant 0 : index
    %c4_32 = arith.constant 4 : index
    %c0_33 = arith.constant 0 : index
    %c0_34 = arith.constant 0 : index
    %23 = vector.load %arg3[%c0_31, %c4_32, %c0_33, %c0_34] : memref<1x6x8x9xf32, #tpu.memory_space<vmem>>, vector<1x1x1x9xf32>
    %24 = vector.shape_cast %23 : vector<1x1x1x9xf32> to vector<1x9xf32>
    %25 = tpu.concatenate %22, %24 in 0 : vector<7x9xf32>, vector<1x9xf32> -> vector<8x9xf32>
    %c0_35 = arith.constant 0 : index
    %c5 = arith.constant 5 : index
    %c1_36 = arith.constant 1 : index
    %c0_37 = arith.constant 0 : index
    %26 = vector.load %arg2[%c0_35, %c5, %c1_36, %c0_37] : memref<1x12x8x9xf32, #tpu.memory_space<vmem>>, vector<1x1x7x9xf32>
    %27 = vector.shape_cast %26 : vector<1x1x7x9xf32> to vector<7x9xf32>
    %c0_38 = arith.constant 0 : index
    %c5_39 = arith.constant 5 : index
    %c0_40 = arith.constant 0 : index
    %c0_41 = arith.constant 0 : index
    %28 = vector.load %arg3[%c0_38, %c5_39, %c0_40, %c0_41] : memref<1x6x8x9xf32, #tpu.memory_space<vmem>>, vector<1x1x1x9xf32>
    %29 = vector.shape_cast %28 : vector<1x1x1x9xf32> to vector<1x9xf32>
    %30 = tpu.concatenate %27, %29 in 0 : vector<7x9xf32>, vector<1x9xf32> -> vector<8x9xf32>
    %c0_42 = arith.constant 0 : index
    %c0_43 = arith.constant 0 : index
    %c0_44 = arith.constant 0 : index
    %c0_45 = arith.constant 0 : index
    %31 = vector.load %arg2[%c0_42, %c0_43, %c0_44, %c0_45] : memref<1x12x8x9xf32, #tpu.memory_space<vmem>>, vector<1x1x8x8xf32>
    %32 = vector.shape_cast %31 : vector<1x1x8x8xf32> to vector<8x8xf32>
    %c0_46 = arith.constant 0 : index
    %c3_47 = arith.constant 3 : index
    %c0_48 = arith.constant 0 : index
    %c0_49 = arith.constant 0 : index
    %33 = vector.load %arg2[%c0_46, %c3_47, %c0_48, %c0_49] : memref<1x12x8x9xf32, #tpu.memory_space<vmem>>, vector<1x1x8x8xf32>
    %34 = vector.shape_cast %33 : vector<1x1x8x8xf32> to vector<8x8xf32>
    %c0_50 = arith.constant 0 : index
    %c0_51 = arith.constant 0 : index
    %c0_52 = arith.constant 0 : index
    %c1_53 = arith.constant 1 : index
    %35 = vector.load %arg2[%c0_50, %c0_51, %c0_52, %c1_53] : memref<1x12x8x9xf32, #tpu.memory_space<vmem>>, vector<1x1x8x8xf32>
    %36 = vector.shape_cast %35 : vector<1x1x8x8xf32> to vector<8x8xf32>
    %c0_54 = arith.constant 0 : index
    %c6_55 = arith.constant 6 : index
    %c0_56 = arith.constant 0 : index
    %c0_57 = arith.constant 0 : index
    %37 = vector.load %arg2[%c0_54, %c6_55, %c0_56, %c0_57] : memref<1x12x8x9xf32, #tpu.memory_space<vmem>>, vector<1x1x8x8xf32>
    %38 = vector.shape_cast %37 : vector<1x1x8x8xf32> to vector<8x8xf32>
    %c0_58 = arith.constant 0 : index
    %c9 = arith.constant 9 : index
    %c0_59 = arith.constant 0 : index
    %c0_60 = arith.constant 0 : index
    %39 = vector.load %arg2[%c0_58, %c9, %c0_59, %c0_60] : memref<1x12x8x9xf32, #tpu.memory_space<vmem>>, vector<1x1x8x8xf32>
    %40 = vector.shape_cast %39 : vector<1x1x8x8xf32> to vector<8x8xf32>
    %c0_61 = arith.constant 0 : index
    %c6_62 = arith.constant 6 : index
    %c0_63 = arith.constant 0 : index
    %c1_64 = arith.constant 1 : index
    %41 = vector.load %arg2[%c0_61, %c6_62, %c0_63, %c1_64] : memref<1x12x8x9xf32, #tpu.memory_space<vmem>>, vector<1x1x8x8xf32>
    %42 = vector.shape_cast %41 : vector<1x1x8x8xf32> to vector<8x8xf32>
    %43 = vector.extract_strided_slice %5 {offsets = [0, 0], sizes = [8, 8], strides = [1, 1]} : vector<8x9xf32> to vector<8x8xf32>
    %44 = vector.extract_strided_slice %20 {offsets = [0, 0], sizes = [8, 8], strides = [1, 1]} : vector<8x9xf32> to vector<8x8xf32>
    %45 = vector.extract_strided_slice %5 {offsets = [0, 1], sizes = [8, 8], strides = [1, 1]} : vector<8x9xf32> to vector<8x8xf32>
    %c0_65 = arith.constant 0 : index
    %c1_66 = arith.constant 1 : index
    %c0_67 = arith.constant 0 : index
    %c0_68 = arith.constant 0 : index
    %46 = vector.load %arg2[%c0_65, %c1_66, %c0_67, %c0_68] : memref<1x12x8x9xf32, #tpu.memory_space<vmem>>, vector<1x1x8x8xf32>
    %47 = vector.shape_cast %46 : vector<1x1x8x8xf32> to vector<8x8xf32>
    %c0_69 = arith.constant 0 : index
    %c4_70 = arith.constant 4 : index
    %c0_71 = arith.constant 0 : index
    %c0_72 = arith.constant 0 : index
    %48 = vector.load %arg2[%c0_69, %c4_70, %c0_71, %c0_72] : memref<1x12x8x9xf32, #tpu.memory_space<vmem>>, vector<1x1x8x8xf32>
    %49 = vector.shape_cast %48 : vector<1x1x8x8xf32> to vector<8x8xf32>
    %c0_73 = arith.constant 0 : index
    %c1_74 = arith.constant 1 : index
    %c0_75 = arith.constant 0 : index
    %c1_76 = arith.constant 1 : index
    %50 = vector.load %arg2[%c0_73, %c1_74, %c0_75, %c1_76] : memref<1x12x8x9xf32, #tpu.memory_space<vmem>>, vector<1x1x8x8xf32>
    %51 = vector.shape_cast %50 : vector<1x1x8x8xf32> to vector<8x8xf32>
    %c0_77 = arith.constant 0 : index
    %c7 = arith.constant 7 : index
    %c0_78 = arith.constant 0 : index
    %c0_79 = arith.constant 0 : index
    %52 = vector.load %arg2[%c0_77, %c7, %c0_78, %c0_79] : memref<1x12x8x9xf32, #tpu.memory_space<vmem>>, vector<1x1x8x8xf32>
    %53 = vector.shape_cast %52 : vector<1x1x8x8xf32> to vector<8x8xf32>
    %c0_80 = arith.constant 0 : index
    %c10 = arith.constant 10 : index
    %c0_81 = arith.constant 0 : index
    %c0_82 = arith.constant 0 : index
    %54 = vector.load %arg2[%c0_80, %c10, %c0_81, %c0_82] : memref<1x12x8x9xf32, #tpu.memory_space<vmem>>, vector<1x1x8x8xf32>
    %55 = vector.shape_cast %54 : vector<1x1x8x8xf32> to vector<8x8xf32>
    %c0_83 = arith.constant 0 : index
    %c7_84 = arith.constant 7 : index
    %c0_85 = arith.constant 0 : index
    %c1_86 = arith.constant 1 : index
    %56 = vector.load %arg2[%c0_83, %c7_84, %c0_85, %c1_86] : memref<1x12x8x9xf32, #tpu.memory_space<vmem>>, vector<1x1x8x8xf32>
    %57 = vector.shape_cast %56 : vector<1x1x8x8xf32> to vector<8x8xf32>
    %58 = vector.extract_strided_slice %10 {offsets = [0, 0], sizes = [8, 8], strides = [1, 1]} : vector<8x9xf32> to vector<8x8xf32>
    %59 = vector.extract_strided_slice %25 {offsets = [0, 0], sizes = [8, 8], strides = [1, 1]} : vector<8x9xf32> to vector<8x8xf32>
    %60 = vector.extract_strided_slice %10 {offsets = [0, 1], sizes = [8, 8], strides = [1, 1]} : vector<8x9xf32> to vector<8x8xf32>
    %c0_87 = arith.constant 0 : index
    %c2_88 = arith.constant 2 : index
    %c0_89 = arith.constant 0 : index
    %c0_90 = arith.constant 0 : index
    %61 = vector.load %arg2[%c0_87, %c2_88, %c0_89, %c0_90] : memref<1x12x8x9xf32, #tpu.memory_space<vmem>>, vector<1x1x8x8xf32>
    %62 = vector.shape_cast %61 : vector<1x1x8x8xf32> to vector<8x8xf32>
    %c0_91 = arith.constant 0 : index
    %c5_92 = arith.constant 5 : index
    %c0_93 = arith.constant 0 : index
    %c0_94 = arith.constant 0 : index
    %63 = vector.load %arg2[%c0_91, %c5_92, %c0_93, %c0_94] : memref<1x12x8x9xf32, #tpu.memory_space<vmem>>, vector<1x1x8x8xf32>
    %64 = vector.shape_cast %63 : vector<1x1x8x8xf32> to vector<8x8xf32>
    %c0_95 = arith.constant 0 : index
    %c2_96 = arith.constant 2 : index
    %c0_97 = arith.constant 0 : index
    %c1_98 = arith.constant 1 : index
    %65 = vector.load %arg2[%c0_95, %c2_96, %c0_97, %c1_98] : memref<1x12x8x9xf32, #tpu.memory_space<vmem>>, vector<1x1x8x8xf32>
    %66 = vector.shape_cast %65 : vector<1x1x8x8xf32> to vector<8x8xf32>
    %c0_99 = arith.constant 0 : index
    %c8 = arith.constant 8 : index
    %c0_100 = arith.constant 0 : index
    %c0_101 = arith.constant 0 : index
    %67 = vector.load %arg2[%c0_99, %c8, %c0_100, %c0_101] : memref<1x12x8x9xf32, #tpu.memory_space<vmem>>, vector<1x1x8x8xf32>
    %68 = vector.shape_cast %67 : vector<1x1x8x8xf32> to vector<8x8xf32>
    %c0_102 = arith.constant 0 : index
    %c11 = arith.constant 11 : index
    %c0_103 = arith.constant 0 : index
    %c0_104 = arith.constant 0 : index
    %69 = vector.load %arg2[%c0_102, %c11, %c0_103, %c0_104] : memref<1x12x8x9xf32, #tpu.memory_space<vmem>>, vector<1x1x8x8xf32>
    %70 = vector.shape_cast %69 : vector<1x1x8x8xf32> to vector<8x8xf32>
    %c0_105 = arith.constant 0 : index
    %c8_106 = arith.constant 8 : index
    %c0_107 = arith.constant 0 : index
    %c1_108 = arith.constant 1 : index
    %71 = vector.load %arg2[%c0_105, %c8_106, %c0_107, %c1_108] : memref<1x12x8x9xf32, #tpu.memory_space<vmem>>, vector<1x1x8x8xf32>
    %72 = vector.shape_cast %71 : vector<1x1x8x8xf32> to vector<8x8xf32>
    %73 = vector.extract_strided_slice %15 {offsets = [0, 0], sizes = [8, 8], strides = [1, 1]} : vector<8x9xf32> to vector<8x8xf32>
    %74 = vector.extract_strided_slice %30 {offsets = [0, 0], sizes = [8, 8], strides = [1, 1]} : vector<8x9xf32> to vector<8x8xf32>
    %75 = vector.extract_strided_slice %15 {offsets = [0, 1], sizes = [8, 8], strides = [1, 1]} : vector<8x9xf32> to vector<8x8xf32>
    %cst = arith.constant 1.000000e+00 : f32
    %76 = vector.broadcast %cst : f32 to vector<8x8xf32>
    %77 = tpu.concatenate %32, %34, %36, %38, %40, %42, %43, %44, %45, %47, %49, %51, %53, %55, %57, %58 in 0 : vector<8x8xf32>, vector<8x8xf32>, vector<8x8xf32>, vector<8x8xf32>, vector<8x8xf32>, vector<8x8xf32>, vector<8x8xf32>, vector<8x8xf32>, vector<8x8xf32>, vector<8x8xf32>, vector<8x8xf32>, vector<8x8xf32>, vector<8x8xf32>, vector<8x8xf32>, vector<8x8xf32>, vector<8x8xf32> -> vector<128x8xf32>
    %78 = tpu.concatenate %59, %60, %62, %64, %66, %68, %70, %72, %73, %74, %75, %76 in 0 : vector<8x8xf32>, vector<8x8xf32>, vector<8x8xf32>, vector<8x8xf32>, vector<8x8xf32>, vector<8x8xf32>, vector<8x8xf32>, vector<8x8xf32>, vector<8x8xf32>, vector<8x8xf32>, vector<8x8xf32>, vector<8x8xf32> -> vector<96x8xf32>
    %79 = tpu.concatenate %77, %78 in 0 : vector<128x8xf32>, vector<96x8xf32> -> vector<224x8xf32>
    %80 = arith.truncf %79 : vector<224x8xf32> to vector<224x8xbf16>
    %c0_109 = arith.constant 0 : index
    %c0_110 = arith.constant 0 : index
    %81 = vector.load %arg4[%c0_109, %c0_110] : memref<40x224xbf16, #tpu.memory_space<vmem>>, vector<40x224xbf16>
    %cst_111 = arith.constant dense<0.000000e+00> : vector<40x8xf32>
    %82 = tpu.matmul %81, %80, %cst_111 {dimension_numbers = #tpu.dot_dimension_numbers<[1], [0], [0], [1], [0, 0, 1, 1], [], []>} : vector<40x224xbf16>, vector<224x8xbf16>, vector<40x8xf32> -> vector<40x8xf32>
    %cst_112 = arith.constant 0.000000e+00 : f32
    %83 = vector.broadcast %cst_112 : f32 to vector<40x8xf32>
    %84 = arith.cmpf oge, %82, %83 : vector<40x8xf32>
    %85 = vector.broadcast %0 : f32 to vector<40x8xf32>
    %86 = arith.mulf %85, %82 : vector<40x8xf32>
    %87 = arith.select %84, %82, %86 : vector<40x8xi1>, vector<40x8xf32>
    %88 = vector.shape_cast %87 : vector<40x8xf32> to vector<5x8x8xf32>
    %c0_113 = arith.constant 0 : index
    %c0_114 = arith.constant 0 : index
    %c0_115 = arith.constant 0 : index
    %c0_116 = arith.constant 0 : index
    %89 = vector.load %arg6[%c0_113, %c0_114, %c0_115, %c0_116] : memref<1x8x8x8xf32, #tpu.memory_space<vmem>>, vector<1x5x8x8xf32>
    %90 = vector.shape_cast %89 : vector<1x5x8x8xf32> to vector<5x8x8xf32>
    %91 = vector.shape_cast %88 : vector<5x8x8xf32> to vector<1x5x8x8xf32>
    tpu.vector_store %arg6[%c0_113, %c0_114, %c0_115, %c0_116], %91 {strides = array<i32>} : memref<1x8x8x8xf32, #tpu.memory_space<vmem>>, vector<1x5x8x8xf32>,
    %c0_117 = arith.constant 0 : index
    %c9_118 = arith.constant 9 : index
    %c0_119 = arith.constant 0 : index
    %c0_120 = arith.constant 0 : index
    %92 = vector.load %arg2[%c0_117, %c9_118, %c0_119, %c0_120] : memref<1x12x8x9xf32, #tpu.memory_space<vmem>>, vector<1x1x8x8xf32>
    %93 = vector.shape_cast %92 : vector<1x1x8x8xf32> to vector<8x8xf32>
    %c0_121 = arith.constant 0 : index
    %c6_122 = arith.constant 6 : index
    %c0_123 = arith.constant 0 : index
    %c1_124 = arith.constant 1 : index
    %94 = vector.load %arg2[%c0_121, %c6_122, %c0_123, %c1_124] : memref<1x12x8x9xf32, #tpu.memory_space<vmem>>, vector<1x1x8x8xf32>
    %95 = vector.shape_cast %94 : vector<1x1x8x8xf32> to vector<8x8xf32>
    %96 = vector.extract_strided_slice %20 {offsets = [0, 0], sizes = [8, 8], strides = [1, 1]} : vector<8x9xf32> to vector<8x8xf32>
    %97 = vector.extract_strided_slice %5 {offsets = [0, 1], sizes = [8, 8], strides = [1, 1]} : vector<8x9xf32> to vector<8x8xf32>
    %98 = arith.maximumf %93, %95 : vector<8x8xf32>
    %99 = arith.maximumf %96, %97 : vector<8x8xf32>
    %100 = arith.maximumf %98, %99 : vector<8x8xf32>
    %c0_125 = arith.constant 0 : index
    %101 = memref.load %arg5[%c0_125] : memref<7xf32, #tpu.memory_space<smem>>
    %102 = vector.broadcast %101 : f32 to vector<8x8xf32>
    %103 = arith.mulf %100, %102 : vector<8x8xf32>
    %c3_126 = arith.constant 3 : index
    %104 = memref.load %arg5[%c3_126] : memref<7xf32, #tpu.memory_space<smem>>
    %105 = vector.broadcast %104 : f32 to vector<8x8xf32>
    %106 = arith.addf %103, %105 : vector<8x8xf32>
    %cst_127 = arith.constant 0.000000e+00 : f32
    %107 = vector.broadcast %cst_127 : f32 to vector<8x8xf32>
    %108 = arith.cmpf oge, %106, %107 : vector<8x8xf32>
    %109 = vector.broadcast %0 : f32 to vector<8x8xf32>
    %110 = arith.mulf %109, %106 : vector<8x8xf32>
    %111 = arith.select %108, %106, %110 : vector<8x8xi1>, vector<8x8xf32>
    %c0_128 = arith.constant 0 : index
    %c5_129 = arith.constant 5 : index
    %c0_130 = arith.constant 0 : index
    %c0_131 = arith.constant 0 : index
    %112 = vector.load %arg6[%c0_128, %c5_129, %c0_130, %c0_131] : memref<1x8x8x8xf32, #tpu.memory_space<vmem>>, vector<1x1x8x8xf32>
    %113 = vector.shape_cast %112 : vector<1x1x8x8xf32> to vector<8x8xf32>
    %114 = vector.shape_cast %111 : vector<8x8xf32> to vector<1x1x8x8xf32>
    tpu.vector_store %arg6[%c0_128, %c5_129, %c0_130, %c0_131], %114 {strides = array<i32>} : memref<1x8x8x8xf32, #tpu.memory_space<vmem>>, vector<1x1x8x8xf32>,
    %c0_132 = arith.constant 0 : index
    %c10_133 = arith.constant 10 : index
    %c0_134 = arith.constant 0 : index
    %c0_135 = arith.constant 0 : index
    %115 = vector.load %arg2[%c0_132, %c10_133, %c0_134, %c0_135] : memref<1x12x8x9xf32, #tpu.memory_space<vmem>>, vector<1x1x8x8xf32>
    %116 = vector.shape_cast %115 : vector<1x1x8x8xf32> to vector<8x8xf32>
    %c0_136 = arith.constant 0 : index
    %c7_137 = arith.constant 7 : index
    %c0_138 = arith.constant 0 : index
    %c1_139 = arith.constant 1 : index
    %117 = vector.load %arg2[%c0_136, %c7_137, %c0_138, %c1_139] : memref<1x12x8x9xf32, #tpu.memory_space<vmem>>, vector<1x1x8x8xf32>
    %118 = vector.shape_cast %117 : vector<1x1x8x8xf32> to vector<8x8xf32>
    %119 = vector.extract_strided_slice %25 {offsets = [0, 0], sizes = [8, 8], strides = [1, 1]} : vector<8x9xf32> to vector<8x8xf32>
    %120 = vector.extract_strided_slice %10 {offsets = [0, 1], sizes = [8, 8], strides = [1, 1]} : vector<8x9xf32> to vector<8x8xf32>
    %121 = arith.maximumf %116, %118 : vector<8x8xf32>
    %122 = arith.maximumf %119, %120 : vector<8x8xf32>
    %123 = arith.maximumf %121, %122 : vector<8x8xf32>
    %c1_140 = arith.constant 1 : index
    %124 = memref.load %arg5[%c1_140] : memref<7xf32, #tpu.memory_space<smem>>
    %125 = vector.broadcast %124 : f32 to vector<8x8xf32>
    %126 = arith.mulf %123, %125 : vector<8x8xf32>
    %c4_141 = arith.constant 4 : index
    %127 = memref.load %arg5[%c4_141] : memref<7xf32, #tpu.memory_space<smem>>
    %128 = vector.broadcast %127 : f32 to vector<8x8xf32>
    %129 = arith.addf %126, %128 : vector<8x8xf32>
    %cst_142 = arith.constant 0.000000e+00 : f32
    %130 = vector.broadcast %cst_142 : f32 to vector<8x8xf32>
    %131 = arith.cmpf oge, %129, %130 : vector<8x8xf32>
    %132 = vector.broadcast %0 : f32 to vector<8x8xf32>
    %133 = arith.mulf %132, %129 : vector<8x8xf32>
    %134 = arith.select %131, %129, %133 : vector<8x8xi1>, vector<8x8xf32>
    %c0_143 = arith.constant 0 : index
    %c6_144 = arith.constant 6 : index
    %c0_145 = arith.constant 0 : index
    %c0_146 = arith.constant 0 : index
    %135 = vector.load %arg6[%c0_143, %c6_144, %c0_145, %c0_146] : memref<1x8x8x8xf32, #tpu.memory_space<vmem>>, vector<1x1x8x8xf32>
    %136 = vector.shape_cast %135 : vector<1x1x8x8xf32> to vector<8x8xf32>
    %137 = vector.shape_cast %134 : vector<8x8xf32> to vector<1x1x8x8xf32>
    tpu.vector_store %arg6[%c0_143, %c6_144, %c0_145, %c0_146], %137 {strides = array<i32>} : memref<1x8x8x8xf32, #tpu.memory_space<vmem>>, vector<1x1x8x8xf32>,
    %c0_147 = arith.constant 0 : index
    %c11_148 = arith.constant 11 : index
    %c0_149 = arith.constant 0 : index
    %c0_150 = arith.constant 0 : index
    %138 = vector.load %arg2[%c0_147, %c11_148, %c0_149, %c0_150] : memref<1x12x8x9xf32, #tpu.memory_space<vmem>>, vector<1x1x8x8xf32>
    %139 = vector.shape_cast %138 : vector<1x1x8x8xf32> to vector<8x8xf32>
    %c0_151 = arith.constant 0 : index
    %c8_152 = arith.constant 8 : index
    %c0_153 = arith.constant 0 : index
    %c1_154 = arith.constant 1 : index
    %140 = vector.load %arg2[%c0_151, %c8_152, %c0_153, %c1_154] : memref<1x12x8x9xf32, #tpu.memory_space<vmem>>, vector<1x1x8x8xf32>
    %141 = vector.shape_cast %140 : vector<1x1x8x8xf32> to vector<8x8xf32>
    %142 = vector.extract_strided_slice %30 {offsets = [0, 0], sizes = [8, 8], strides = [1, 1]} : vector<8x9xf32> to vector<8x8xf32>
    %143 = vector.extract_strided_slice %15 {offsets = [0, 1], sizes = [8, 8], strides = [1, 1]} : vector<8x9xf32> to vector<8x8xf32>
    %144 = arith.maximumf %139, %141 : vector<8x8xf32>
    %145 = arith.maximumf %142, %143 : vector<8x8xf32>
    %146 = arith.maximumf %144, %145 : vector<8x8xf32>
    %c2_155 = arith.constant 2 : index
    %147 = memref.load %arg5[%c2_155] : memref<7xf32, #tpu.memory_space<smem>>
    %148 = vector.broadcast %147 : f32 to vector<8x8xf32>
    %149 = arith.mulf %146, %148 : vector<8x8xf32>
    %c5_156 = arith.constant 5 : index
    %150 = memref.load %arg5[%c5_156] : memref<7xf32, #tpu.memory_space<smem>>
    %151 = vector.broadcast %150 : f32 to vector<8x8xf32>
    %152 = arith.addf %149, %151 : vector<8x8xf32>
    %cst_157 = arith.constant 0.000000e+00 : f32
    %153 = vector.broadcast %cst_157 : f32 to vector<8x8xf32>
    %154 = arith.cmpf oge, %152, %153 : vector<8x8xf32>
    %155 = vector.broadcast %0 : f32 to vector<8x8xf32>
    %156 = arith.mulf %155, %152 : vector<8x8xf32>
    %157 = arith.select %154, %152, %156 : vector<8x8xi1>, vector<8x8xf32>
    %c0_158 = arith.constant 0 : index
    %c7_159 = arith.constant 7 : index
    %c0_160 = arith.constant 0 : index
    %c0_161 = arith.constant 0 : index
    %158 = vector.load %arg6[%c0_158, %c7_159, %c0_160, %c0_161] : memref<1x8x8x8xf32, #tpu.memory_space<vmem>>, vector<1x1x8x8xf32>
    %159 = vector.shape_cast %158 : vector<1x1x8x8xf32> to vector<8x8xf32>
    %160 = vector.shape_cast %157 : vector<8x8xf32> to vector<1x1x8x8xf32>
    tpu.vector_store %arg6[%c0_158, %c7_159, %c0_160, %c0_161], %160 {strides = array<i32>} : memref<1x8x8x8xf32, #tpu.memory_space<vmem>>, vector<1x1x8x8xf32>,
    return
  }
  func.func @transform_0(%arg0: i32, %arg1: i32) -> (i32, i32, i32, i32) {
    %c0_i32 = arith.constant 0 : i32
    %c0_i32_0 = arith.constant 0 : i32
    %c0_i32_1 = arith.constant 0 : i32
    return %arg0, %c0_i32, %arg1, %c0_i32_0 : i32, i32, i32, i32
  }
  func.func @transform_1(%arg0: i32, %arg1: i32) -> (i32, i32, i32, i32) {
    %c1_i32 = arith.constant 1 : i32
    %0 = arith.addi %arg1, %c1_i32 : i32
    %c1_i32_0 = arith.constant 1 : i32
    %1 = arith.muli %0, %c1_i32_0 : i32
    %c0_i32 = arith.constant 0 : i32
    %c0_i32_1 = arith.constant 0 : i32
    %c0_i32_2 = arith.constant 0 : i32
    return %arg0, %c0_i32, %1, %c0_i32_1 : i32, i32, i32, i32
  }
  func.func @transform_2(%arg0: i32, %arg1: i32) -> (i32, i32) {
    %c0_i32 = arith.constant 0 : i32
    %c0_i32_0 = arith.constant 0 : i32
    %c0_i32_1 = arith.constant 0 : i32
    return %c0_i32, %c0_i32_0 : i32, i32
  }
  func.func @transform_3(%arg0: i32, %arg1: i32) -> i32 {
    %c0_i32 = arith.constant 0 : i32
    %c0_i32_0 = arith.constant 0 : i32
    return %c0_i32 : i32
  }
  func.func @transform_4(%arg0: i32, %arg1: i32) -> (i32, i32, i32, i32) {
    %c0_i32 = arith.constant 0 : i32
    %c0_i32_0 = arith.constant 0 : i32
    %c0_i32_1 = arith.constant 0 : i32
    return %arg0, %c0_i32, %arg1, %c0_i32_0 : i32, i32, i32, i32
  }
}

</mosaic_0001>

<llo_original>
// kernel: tpu_custom_call.1
$region0: #{tpu_custom_call.1}
  #allocation0 [shape = 'u32[]', space=smem, size = 0x4, offset = 0x4, fixed_abs, tag = 'smem constant byte address 0x4 - core index']
  #allocation1 [shape = 'u32[72,128]{1,0:T(1,128)}', space=vmem, size = 0x9000, scoped, tag = 'internal scratch']
  %s0 = inlined_call_operand.vmem [shape: f32[2,12,9,9], index: 0, kind: input, shape index: {}]
  %s1 = inlined_call_operand.vmem [shape: f32[2,12,9,9], index: 1, kind: input, shape index: {}]
  %s2 = inlined_call_operand.vmem [shape: bf16[40,224], index: 2, kind: input, shape index: {}]
  %s3 = inlined_call_operand.vmem [shape: f32[7], index: 3, kind: input, shape index: {}]
  %s4 = inlined_call_operand.hbm [shape: f32[2,8,8,8], index: 4, kind: output, shape index: {}]
  %s5 = sld [smem:[#allocation0]]
  $region129: #{tpu_custom_call.1} parent=0
    _
  %s7 = ssub.s32 1, %s5
  %s8 = scalar_select 0, %s7, %s5
  $region1: #{tpu_custom_call.1} parent=0
    #allocation2 [shape = 'u8[98304]{0}', space=vmem, size = 0x18000, scoped, tag = 'input window, operand 0']
    #allocation3 [shape = 'u8[49152]{0}', space=vmem, size = 0xc000, scoped, tag = 'input window, operand 1']
    #allocation4 [shape = 'u8[512]{0}', space=smem, size = 0x200, scoped, tag = 'input window, operand 3, single buffered']
    #allocation5 [shape = 's32[2]{0}', space=sflag, size = 0x8, scoped, tag = 'scoped memory for tpu_custom_call.1']
    #allocation6 [shape = 's32[2]{0}', space=sflag, size = 0x8, scoped, tag = 'scoped memory for tpu_custom_call.1']
    #allocation7 [shape = 'u8[65536]{0}', space=vmem, size = 0x10000, scoped, tag = 'output window, operand 0']
    %9 = vsyncpa [#allocation6], 0
    %10 = vsyncpa [#allocation5], 0
    %s11 = scalar_lea.sflag [#allocation5], 1
    %12 = vsyncpa %s11, 0
    loop: start=0, step=1, limit=4
    $region2: #{tpu_custom_call.1} parent=1 // loop_pre_header
      _
    $region3: #{tpu_custom_call.1} parent=1 // loop_header
      %s14 = sphi 0, %s18
      %p15 = scmp.ge.s32.totalorder %s14, 4
      %s21 = sphi 0, %s33
      %s22 = sphi 0, %s29
      %s23 = sphi 0, %s21
      %s24 = sphi 0, %s22
      %s25 = sphi 0, %s23
      %s26 = sphi 0, %s24
      %s38 = sphi 0, %s40
      %s41 = sphi 0, %s38
      %s42 = sphi 0, %s41
      %s58 = sphi 0, %s42
      %s68 = sphi 0, %s70
      %s71 = sphi 0, %s68
      %s72 = sphi 0, %s71
      %s88 = sphi 0, %s72
      %s92 = sphi 0, %s92
      %s94 = sphi 0, %s92
      %s95 = sphi 0, %s94
      %s109 = sphi 0, %s95
      %s113 = sphi 0, %s113
      %s115 = sphi 0, %s113
      %s116 = sphi 0, %s115
      %s130 = sphi 0, %s116
      %s138 = sphi 0, %s140
      %s141 = sphi 0, %s138
      %s142 = sphi 0, %s141
      %s158 = sphi 0, %s142
    $region4: #{tpu_custom_call.1} parent=1 // loop_header_branch
      %17 = sbr.rel (%p15) target = $region8
    $region5: #{tpu_custom_call.1} parent=1 // loop_body
      %s19 = ssub.s32 %s14, 1
      %s20 = ssub.s32 %s14, 2
      %s27 = sadd.s32 1, %s22
      %p28 = scmp.ge.s32.totalorder %s27, 1
      %s29 = scalar_select %p28, 0, %s27
      %s30 = sadd.s32 1, %s21
      %s31 = scalar_select %p28, %s30, %s21
      %p32 = scmp.ge.s32.totalorder %s31, 2
      %s33 = scalar_select %p32, 0, %s31
      %s34 = ssub.s32 %s21, %s33
      %s35 = ssub.s32 %s22, %s29
      %s36 = sor.u32 %s34, %s35
      %p37 = scmp.eq.s32.totalorder %s36, 0
      %s39 = sadd.s32 %s38, 1
      %s40 = scalar_select %p37, %s38, %s39
      %p43 = pneg %p37
      %p44 = scmp.eq.s32.totalorder %s14, 1
      %p45 = por %p43, %p44
      %p46 = scmp.ne.s32.totalorder %s38, %s41
      %p47 = scmp.eq.s32.totalorder %s14, 0
      %p48 = por %p46, %p47
      %p49 = scmp.ne.s32.totalorder %s38, %s41
      %p50 = scmp.eq.s32.totalorder %s19, 1
      %p51 = por %p49, %p50
      %p52 = scmp.ne.s32.totalorder %s41, %s42
      %p53 = scmp.eq.s32.totalorder %s19, 0
      %p54 = por %p52, %p53
      %p55 = scmp.ne.s32.totalorder %s41, %s42
      %p56 = scmp.eq.s32.totalorder %s20, 1
      %p57 = por %p55, %p56
      %p59 = scmp.ne.s32.totalorder %s42, %s58
      %p60 = scmp.eq.s32.totalorder %s20, 0
      %p61 = por %p59, %p60
      %s62 = sadd.s32 %s22, 1
      %s63 = sadd.s32 %s29, 1
      %s64 = ssub.s32 %s21, %s33
      %s65 = ssub.s32 %s62, %s63
      %s66 = sor.u32 %s64, %s65
      %p67 = scmp.eq.s32.totalorder %s66, 0
      %s69 = sadd.s32 %s68, 1
      %s70 = scalar_select %p67, %s68, %s69
      %p73 = pneg %p67
      %p74 = scmp.eq.s32.totalorder %s14, 1
      %p75 = por %p73, %p74
      %p76 = scmp.ne.s32.totalorder %s68, %s71
      %p77 = scmp.eq.s32.totalorder %s14, 0
      %p78 = por %p76, %p77
      %p79 = scmp.ne.s32.totalorder %s68, %s71
      %p80 = scmp.eq.s32.totalorder %s19, 1
      %p81 = por %p79, %p80
      %p82 = scmp.ne.s32.totalorder %s71, %s72
      %p83 = scmp.eq.s32.totalorder %s19, 0
      %p84 = por %p82, %p83
      %p85 = scmp.ne.s32.totalorder %s71, %s72
      %p86 = scmp.eq.s32.totalorder %s20, 1
      %p87 = por %p85, %p86
      %p89 = scmp.ne.s32.totalorder %s72, %s88
      %p90 = scmp.eq.s32.totalorder %s20, 0
      %p91 = por %p89, %p90
      %s93 = sadd.s32 %s92, 1
      %p96 = scmp.eq.s32.totalorder %s14, 1
      %p97 = scmp.ne.s32.totalorder %s92, %s94
      %p98 = scmp.eq.s32.totalorder %s14, 0
      %p99 = por %p97, %p98
      %p100 = scmp.ne.s32.totalorder %s92, %s94
      %p101 = scmp.eq.s32.totalorder %s19, 1
      %p102 = por %p100, %p101
      %p103 = scmp.ne.s32.totalorder %s94, %s95
      %p104 = scmp.eq.s32.totalorder %s19, 0
      %p105 = por %p103, %p104
      %p106 = scmp.ne.s32.totalorder %s94, %s95
      %p107 = scmp.eq.s32.totalorder %s20, 1
      %p108 = por %p106, %p107
      %p110 = scmp.ne.s32.totalorder %s95, %s109
      %p111 = scmp.eq.s32.totalorder %s20, 0
      %p112 = por %p110, %p111
      %s114 = sadd.s32 %s113, 1
      %p117 = scmp.eq.s32.totalorder %s14, 1
      %p118 = scmp.ne.s32.totalorder %s113, %s115
      %p119 = scmp.eq.s32.totalorder %s14, 0
      %p120 = por %p118, %p119
      %p121 = scmp.ne.s32.totalorder %s113, %s115
      %p122 = scmp.eq.s32.totalorder %s19, 1
      %p123 = por %p121, %p122
      %p124 = scmp.ne.s32.totalorder %s115, %s116
      %p125 = scmp.eq.s32.totalorder %s19, 0
      %p126 = por %p124, %p125
      %p127 = scmp.ne.s32.totalorder %s115, %s116
      %p128 = scmp.eq.s32.totalorder %s20, 1
      %p129 = por %p127, %p128
      %p131 = scmp.ne.s32.totalorder %s116, %s130
      %p132 = scmp.eq.s32.totalorder %s20, 0
      %p133 = por %p131, %p132
      %s134 = ssub.s32 %s21, %s33
      %s135 = ssub.s32 %s22, %s29
      %s136 = sor.u32 %s134, %s135
      %p137 = scmp.eq.s32.totalorder %s136, 0
      %s139 = sadd.s32 %s138, 1
      %s140 = scalar_select %p137, %s138, %s139
      %p143 = pneg %p137
      %p144 = scmp.eq.s32.totalorder %s14, 1
      %p145 = por %p143, %p144
      %p146 = scmp.ne.s32.totalorder %s138, %s141
      %p147 = scmp.eq.s32.totalorder %s14, 0
      %p148 = por %p146, %p147
      %p149 = scmp.ne.s32.totalorder %s138, %s141
      %p150 = scmp.eq.s32.totalorder %s19, 1
      %p151 = por %p149, %p150
      %p152 = scmp.ne.s32.totalorder %s141, %s142
      %p153 = scmp.eq.s32.totalorder %s19, 0
      %p154 = por %p152, %p153
      %p155 = scmp.ne.s32.totalorder %s141, %s142
      %p156 = scmp.eq.s32.totalorder %s20, 1
      %p157 = por %p155, %p156
      %p159 = scmp.ne.s32.totalorder %s142, %s158
      %p160 = scmp.eq.s32.totalorder %s20, 0
      %p161 = por %p159, %p160
      %p162 = scmp.le.s32.totalorder 1, %s14
      %p163 = scmp.lt.s32.totalorder %s14, 3
      %p164 = pnand %p162, %p163
      %p165 = pneg %p164
      // Predicated region
      $region9: #{tpu_custom_call.1} parent=5 // pred_check
        _
      $region10: #{tpu_custom_call.1} parent=5 // pred_check_branch
        %167 = sbr.rel (%p164) target = $region12
      $region11: #{tpu_custom_call.1} parent=5 // pred_region
        %s168 = ssub.s32 %s14, 1
        // Predicated region
        $region13: #{tpu_custom_call.1} parent=11 // pred_check
          %p169 = pneg %p105
        $region14: #{tpu_custom_call.1} parent=11 // pred_check_branch
          %171 = sbr.rel (%p169) target = $region16
        $region15: #{tpu_custom_call.1} parent=11 // pred_region
          _
        $region16: #{tpu_custom_call.1} parent=11 // pred_fallthru
          _
        // Predicated region
        $region17: #{tpu_custom_call.1} parent=11 // pred_check
          %p172 = pneg %p126
        $region18: #{tpu_custom_call.1} parent=11 // pred_check_branch
          %174 = sbr.rel (%p172) target = $region20
        $region19: #{tpu_custom_call.1} parent=11 // pred_region
          %176 = vsyncadd [#allocation6], 0
          %s178 = sshll.u32 %s3, 4
          %s179 = int_to_ptr.vmem [resolvable:$true] %s178
          %181 = dma.vmem_to_smem %s179, 16, [#allocation4], [#allocation6]
        $region20: #{tpu_custom_call.1} parent=11 // pred_fallthru
          _
      $region12: #{tpu_custom_call.1} parent=5 // pred_fallthru
        _
      %p182 = scmp.lt.s32.totalorder %s14, 2
      // Predicated region
      $region21: #{tpu_custom_call.1} parent=5 // pred_check
        %p183 = pneg %p182
      $region22: #{tpu_custom_call.1} parent=5 // pred_check_branch
        %185 = sbr.rel (%p183) target = $region24
      $region23: #{tpu_custom_call.1} parent=5 // pred_region
        // Predicated region
        $region25: #{tpu_custom_call.1} parent=23 // pred_check
          %p186 = pneg %p48
        $region26: #{tpu_custom_call.1} parent=23 // pred_check_branch
          %188 = sbr.rel (%p186) target = $region28
        $region27: #{tpu_custom_call.1} parent=23 // pred_region
          %s189 = sand.u32 %s38, 1
          %s190 = sand.u32 %s38, 1
          %s191 = smul.addr %s190, 96
          %s192 = scalar_lea.vmem [#allocation2], %s191
          %s193 = smul.addr %s21, 24
          %s194 = sadd.s32 %s22, %s193
          %s195 = smul.addr %s194, 8
          %s196 = scalar_lea.vmem %s0, %s195
          // Predicated region
          $region29: #{tpu_custom_call.1} parent=27 // pred_check
            _
          $region30: #{tpu_custom_call.1} parent=27 // pred_check_branch
            %198 = sbr.rel (0) target = $region32
          $region31: #{tpu_custom_call.1} parent=27 // pred_region
            // Predicated region
            $region33: #{tpu_custom_call.1} parent=31 // pred_check
              _
            $region34: #{tpu_custom_call.1} parent=31 // pred_check_branch
              %200 = sbr.rel (0) target = $region36
            $region35: #{tpu_custom_call.1} parent=31 // pred_region
              // Predicated region
              $region48: #{tpu_custom_call.1} parent=35 // pred_check
                _
              $region49: #{tpu_custom_call.1} parent=35 // pred_check_branch
                %238 = sbr.rel (0) target = $region51
              $region50: #{tpu_custom_call.1} parent=35 // pred_region
                loop: start=0, step=1, limit=1
                $region52: #{tpu_custom_call.1} parent=50 // loop_pre_header
                  _
                $region53: #{tpu_custom_call.1} parent=50 // loop_header
                  %s240 = sphi 0, %s244
                  %p241 = scmp.ge.s32.totalorder %s240, 1
                  %s245 = sphi %s196, %s196
                  %s246 = sphi %s192, %s192
                $region54: #{tpu_custom_call.1} parent=50 // loop_header_branch
                  %243 = sbr.rel (%p241) target = $region58
                $region55: #{tpu_custom_call.1} parent=50 // loop_body
                  %v247 = vld [vmem:[%s245] sm:$0xff]
                  %248 = vst [vmem:[%s246] sm:$0xff] %v247
                  %v249 = vld [vmem:[%s245 + $0x10] sm:$0xff]
                  %250 = vst [vmem:[%s246 + $0x8] sm:$0xff] %v249
                  %v251 = vld [vmem:[%s245 + $0x20] sm:$0xff]
                  %252 = vst [vmem:[%s246 + $0x10] sm:$0xff] %v251
                  %v253 = vld [vmem:[%s245 + $0x30] sm:$0xff]
                  %254 = vst [vmem:[%s246 + $0x18] sm:$0xff] %v253
                  %v255 = vld [vmem:[%s245 + $0x40] sm:$0xff]
                  %256 = vst [vmem:[%s246 + $0x20] sm:$0xff] %v255
                  %v257 = vld [vmem:[%s245 + $0x50] sm:$0xff]
                  %258 = vst [vmem:[%s246 + $0x28] sm:$0xff] %v257
                  %v259 = vld [vmem:[%s245 + $0x60] sm:$0xff]
                  %260 = vst [vmem:[%s246 + $0x30] sm:$0xff] %v259
                  %v261 = vld [vmem:[%s245 + $0x70] sm:$0xff]
                  %262 = vst [vmem:[%s246 + $0x38] sm:$0xff] %v261
                  %v263 = vld [vmem:[%s245 + $0x80] sm:$0xff]
                  %264 = vst [vmem:[%s246 + $0x40] sm:$0xff] %v263
                  %v265 = vld [vmem:[%s245 + $0x90] sm:$0xff]
                  %266 = vst [vmem:[%s246 + $0x48] sm:$0xff] %v265
                  %v267 = vld [vmem:[%s245 + $0xa0] sm:$0xff]
                  %268 = vst [vmem:[%s246 + $0x50] sm:$0xff] %v267
                  %v269 = vld [vmem:[%s245 + $0xb0] sm:$0xff]
                  %270 = vst [vmem:[%s246 + $0x58] sm:$0xff] %v269
                $region56: #{tpu_custom_call.1} parent=50 // loop_footer
                  %s244 = sadd.s32 1, %s240
                $region57: #{tpu_custom_call.1} parent=50 // loop_footer_branch
                  %239 = sbr.rel target = $region53
                $region58: #{tpu_custom_call.1} parent=50 // loop_exit
                  _
              $region51: #{tpu_custom_call.1} parent=35 // pred_fallthru
                _
              // Predicated region
              $region59: #{tpu_custom_call.1} parent=35 // pred_check
                _
              $region60: #{tpu_custom_call.1} parent=35 // pred_check_branch
                %272 = sbr.rel target = $region62
              $region61: #{tpu_custom_call.1} parent=35 // pred_region
                _
              $region62: #{tpu_custom_call.1} parent=35 // pred_fallthru
                _
            $region36: #{tpu_custom_call.1} parent=31 // pred_fallthru
              _
            // Predicated region
            $region37: #{tpu_custom_call.1} parent=31 // pred_check
              _
            $region38: #{tpu_custom_call.1} parent=31 // pred_check_branch
              %202 = sbr.rel target = $region40
            $region39: #{tpu_custom_call.1} parent=31 // pred_region
              %s204 = ssub.s32 256, 1
              loop: start=0, step=1, limit=1
              $region41: #{tpu_custom_call.1} parent=39 // loop_pre_header
                _
              $region42: #{tpu_custom_call.1} parent=39 // loop_header
                %s206 = sphi 0, %s210
                %p207 = scmp.ge.s32.totalorder %s206, 1
                %s211 = sphi %s196, %s196
                %s212 = sphi %s192, %s192
              $region43: #{tpu_custom_call.1} parent=39 // loop_header_branch
                %209 = sbr.rel (%p207) target = $region47
              $region44: #{tpu_custom_call.1} parent=39 // loop_body
                %v213 = vld [vmem:[%s211] sm:%s204]
                %214 = vst [vmem:[%s212] sm:%s204] %v213
                %v215 = vld [vmem:[%s211 + $0x10] sm:%s204]
                %216 = vst [vmem:[%s212 + $0x8] sm:%s204] %v215
                %v217 = vld [vmem:[%s211 + $0x20] sm:%s204]
                %218 = vst [vmem:[%s212 + $0x10] sm:%s204] %v217
                %v219 = vld [vmem:[%s211 + $0x30] sm:%s204]
                %220 = vst [vmem:[%s212 + $0x18] sm:%s204] %v219
                %v221 = vld [vmem:[%s211 + $0x40] sm:%s204]
                %222 = vst [vmem:[%s212 + $0x20] sm:%s204] %v221
                %v223 = vld [vmem:[%s211 + $0x50] sm:%s204]
                %224 = vst [vmem:[%s212 + $0x28] sm:%s204] %v223
                %v225 = vld [vmem:[%s211 + $0x60] sm:%s204]
                %226 = vst [vmem:[%s212 + $0x30] sm:%s204] %v225
                %v227 = vld [vmem:[%s211 + $0x70] sm:%s204]
                %228 = vst [vmem:[%s212 + $0x38] sm:%s204] %v227
                %v229 = vld [vmem:[%s211 + $0x80] sm:%s204]
                %230 = vst [vmem:[%s212 + $0x40] sm:%s204] %v229
                %v231 = vld [vmem:[%s211 + $0x90] sm:%s204]
                %232 = vst [vmem:[%s212 + $0x48] sm:%s204] %v231
                %v233 = vld [vmem:[%s211 + $0xa0] sm:%s204]
                %234 = vst [vmem:[%s212 + $0x50] sm:%s204] %v233
                %v235 = vld [vmem:[%s211 + $0xb0] sm:%s204]
                %236 = vst [vmem:[%s212 + $0x58] sm:%s204] %v235
              $region45: #{tpu_custom_call.1} parent=39 // loop_footer
                %s210 = sadd.s32 1, %s206
              $region46: #{tpu_custom_call.1} parent=39 // loop_footer_branch
                %205 = sbr.rel target = $region42
              $region47: #{tpu_custom_call.1} parent=39 // loop_exit
                _
            $region40: #{tpu_custom_call.1} parent=31 // pred_fallthru
              _
          $region32: #{tpu_custom_call.1} parent=27 // pred_fallthru
            _
          %273 = vnop
        $region28: #{tpu_custom_call.1} parent=23 // pred_fallthru
          _
        // Predicated region
        $region63: #{tpu_custom_call.1} parent=23 // pred_check
          %p274 = pneg %p78
        $region64: #{tpu_custom_call.1} parent=23 // pred_check_branch
          %276 = sbr.rel (%p274) target = $region66
        $region65: #{tpu_custom_call.1} parent=23 // pred_region
          %s277 = sand.u32 %s68, 1
          %s278 = sand.u32 %s68, 1
          %s279 = smul.addr %s278, 48
          %s280 = scalar_lea.vmem [#allocation3], %s279
          %s281 = sadd.s32 %s22, 1
          %s282 = smul.addr %s21, 24
          %s283 = sadd.s32 %s281, %s282
          %s284 = smul.addr %s283, 8
          %s285 = scalar_lea.vmem %s1, %s284
          // Predicated region
          $region67: #{tpu_custom_call.1} parent=65 // pred_check
            _
          $region68: #{tpu_custom_call.1} parent=65 // pred_check_branch
            %287 = sbr.rel (0) target = $region70
          $region69: #{tpu_custom_call.1} parent=65 // pred_region
            // Predicated region
            $region71: #{tpu_custom_call.1} parent=69 // pred_check
              _
            $region72: #{tpu_custom_call.1} parent=69 // pred_check_branch
              %289 = sbr.rel (0) target = $region74
            $region73: #{tpu_custom_call.1} parent=69 // pred_region
              // Predicated region
              $region86: #{tpu_custom_call.1} parent=73 // pred_check
                _
              $region87: #{tpu_custom_call.1} parent=73 // pred_check_branch
                %315 = sbr.rel (0) target = $region89
              $region88: #{tpu_custom_call.1} parent=73 // pred_region
                loop: start=0, step=1, limit=1
                $region90: #{tpu_custom_call.1} parent=88 // loop_pre_header
                  _
                $region91: #{tpu_custom_call.1} parent=88 // loop_header
                  %s317 = sphi 0, %s321
                  %p318 = scmp.ge.s32.totalorder %s317, 1
                  %s322 = sphi %s285, %s285
                  %s323 = sphi %s280, %s280
                $region92: #{tpu_custom_call.1} parent=88 // loop_header_branch
                  %320 = sbr.rel (%p318) target = $region96
                $region93: #{tpu_custom_call.1} parent=88 // loop_body
                  %v324 = vld [vmem:[%s322] sm:$0xff]
                  %325 = vst [vmem:[%s323] sm:$0xff] %v324
                  %v326 = vld [vmem:[%s322 + $0x10] sm:$0xff]
                  %327 = vst [vmem:[%s323 + $0x8] sm:$0xff] %v326
                  %v328 = vld [vmem:[%s322 + $0x20] sm:$0xff]
                  %329 = vst [vmem:[%s323 + $0x10] sm:$0xff] %v328
                  %v330 = vld [vmem:[%s322 + $0x30] sm:$0xff]
                  %331 = vst [vmem:[%s323 + $0x18] sm:$0xff] %v330
                  %v332 = vld [vmem:[%s322 + $0x40] sm:$0xff]
                  %333 = vst [vmem:[%s323 + $0x20] sm:$0xff] %v332
                  %v334 = vld [vmem:[%s322 + $0x50] sm:$0xff]
                  %335 = vst [vmem:[%s323 + $0x28] sm:$0xff] %v334
                $region94: #{tpu_custom_call.1} parent=88 // loop_footer
                  %s321 = sadd.s32 1, %s317
                $region95: #{tpu_custom_call.1} parent=88 // loop_footer_branch
                  %316 = sbr.rel target = $region91
                $region96: #{tpu_custom_call.1} parent=88 // loop_exit
                  _
              $region89: #{tpu_custom_call.1} parent=73 // pred_fallthru
                _
              // Predicated region
              $region97: #{tpu_custom_call.1} parent=73 // pred_check
                _
              $region98: #{tpu_custom_call.1} parent=73 // pred_check_branch
                %337 = sbr.rel target = $region100
              $region99: #{tpu_custom_call.1} parent=73 // pred_region
                _
              $region100: #{tpu_custom_call.1} parent=73 // pred_fallthru
                _
            $region74: #{tpu_custom_call.1} parent=69 // pred_fallthru
              _
            // Predicated region
            $region75: #{tpu_custom_call.1} parent=69 // pred_check
              _
            $region76: #{tpu_custom_call.1} parent=69 // pred_check_branch
              %291 = sbr.rel target = $region78
            $region77: #{tpu_custom_call.1} parent=69 // pred_region
              %s293 = ssub.s32 256, 1
              loop: start=0, step=1, limit=1
              $region79: #{tpu_custom_call.1} parent=77 // loop_pre_header
                _
              $region80: #{tpu_custom_call.1} parent=77 // loop_header
                %s295 = sphi 0, %s299
                %p296 = scmp.ge.s32.totalorder %s295, 1
                %s300 = sphi %s285, %s285
                %s301 = sphi %s280, %s280
              $region81: #{tpu_custom_call.1} parent=77 // loop_header_branch
                %298 = sbr.rel (%p296) target = $region85
              $region82: #{tpu_custom_call.1} parent=77 // loop_body
                %v302 = vld [vmem:[%s300] sm:%s293]
                %303 = vst [vmem:[%s301] sm:%s293] %v302
                %v304 = vld [vmem:[%s300 + $0x10] sm:%s293]
                %305 = vst [vmem:[%s301 + $0x8] sm:%s293] %v304
                %v306 = vld [vmem:[%s300 + $0x20] sm:%s293]
                %307 = vst [vmem:[%s301 + $0x10] sm:%s293] %v306
                %v308 = vld [vmem:[%s300 + $0x30] sm:%s293]
                %309 = vst [vmem:[%s301 + $0x18] sm:%s293] %v308
                %v310 = vld [vmem:[%s300 + $0x40] sm:%s293]
                %311 = vst [vmem:[%s301 + $0x20] sm:%s293] %v310
                %v312 = vld [vmem:[%s300 + $0x50] sm:%s293]
                %313 = vst [vmem:[%s301 + $0x28] sm:%s293] %v312
              $region83: #{tpu_custom_call.1} parent=77 // loop_footer
                %s299 = sadd.s32 1, %s295
              $region84: #{tpu_custom_call.1} parent=77 // loop_footer_branch
                %294 = sbr.rel target = $region80
              $region85: #{tpu_custom_call.1} parent=77 // loop_exit
                _
            $region78: #{tpu_custom_call.1} parent=69 // pred_fallthru
              _
          $region70: #{tpu_custom_call.1} parent=65 // pred_fallthru
            _
          %338 = vnop
        $region66: #{tpu_custom_call.1} parent=23 // pred_fallthru
          _
      $region24: #{tpu_custom_call.1} parent=5 // pred_fallthru
        _
      %p339 = scmp.le.s32.totalorder 1, %s14
      %p340 = scmp.lt.s32.totalorder %s14, 3
      %p341 = pnand %p339, %p340
      %p342 = pneg %p341
      // Predicated region
      $region101: #{tpu_custom_call.1} parent=5 // pred_check
        _
      $region102: #{tpu_custom_call.1} parent=5 // pred_check_branch
        %344 = sbr.rel (%p341) target = $region104
      $region103: #{tpu_custom_call.1} parent=5 // pred_region
        %s345 = ssub.s32 %s14, 1
        %s346 = sand.u32 %s41, 1
        %s347 = sand.u32 %s41, 1
        %s348 = smul.addr %s347, 96
        %s349 = scalar_lea.vmem [#allocation2], %s348
        // Predicated region
        $region105: #{tpu_custom_call.1} parent=103 // pred_check
          %p350 = pneg %p54
        $region106: #{tpu_custom_call.1} parent=103 // pred_check_branch
          %352 = sbr.rel (%p350) target = $region108
        $region107: #{tpu_custom_call.1} parent=103 // pred_region
          _
        $region108: #{tpu_custom_call.1} parent=103 // pred_fallthru
          _
        %s353 = sand.u32 %s71, 1
        %s354 = sand.u32 %s71, 1
        %s355 = smul.addr %s354, 48
        %s356 = scalar_lea.vmem [#allocation3], %s355
        // Predicated region
        $region109: #{tpu_custom_call.1} parent=103 // pred_check
          %p357 = pneg %p84
        $region110: #{tpu_custom_call.1} parent=103 // pred_check_branch
          %359 = sbr.rel (%p357) target = $region112
        $region111: #{tpu_custom_call.1} parent=103 // pred_region
          _
        $region112: #{tpu_custom_call.1} parent=103 // pred_fallthru
          _
        // Predicated region
        $region113: #{tpu_custom_call.1} parent=103 // pred_check
          %p360 = pneg %p126
        $region114: #{tpu_custom_call.1} parent=103 // pred_check_branch
          %362 = sbr.rel (%p360) target = $region116
        $region115: #{tpu_custom_call.1} parent=103 // pred_region
          %364 = dma.done [#allocation6], 16
        $region116: #{tpu_custom_call.1} parent=103 // pred_fallthru
          _
        %365 = sfence
        %s366 = sand.u32 %s41, 1
        %s367 = sand.u32 %s41, 1
        %s368 = smul.addr %s367, 96
        %s369 = scalar_lea.vmem [#allocation2], %s368
        %p370 = pneg %p54
        %p371 = pneg %p51
        %s372 = sand.u32 %s71, 1
        %s373 = sand.u32 %s71, 1
        %s374 = smul.addr %s373, 48
        %s375 = scalar_lea.vmem [#allocation3], %s374
        %p376 = pneg %p84
        %p377 = pneg %p81
        %p378 = pneg %p105
        %p379 = pneg %p102
        %p380 = pneg %p126
        %p381 = pneg %p123
        %p382 = pneg %p154
        %p383 = pneg %p151
        %s384 = sand.u32 %s141, 1
        %s385 = scalar_lea.sflag [#allocation5], %s384
        %s386 = sand.u32 %s141, 1
        %s387 = smul.addr %s386, 64
        %s388 = scalar_lea.vmem [#allocation7], %s387
        %s389 = sadd.s32 %s24, 1
        %s391 = sld [smem:[#allocation4 + $0x6]]
        %v392 = vld [vmem:[%s349 + $0x1] sm:$0x7f]
        %v393 = vld [vmem:[%s356] sm:$0x1]
        %v395 = vrot.slane %v393, 1
        %vm397 = vcmask 1046528
        %v398 = vsel %vm397, %v392, %v395
        %s399 = scalar_lea.vmem %s349, 8 [#allocation2]
        %v400 = vld [vmem:[%s399 + $0x1] sm:$0x7f]
        %s401 = scalar_lea.vmem %s356, 8 [#allocation3]
        %v402 = vld [vmem:[%s401] sm:$0x1]
        %v404 = vrot.slane %v402, 1
        %v406 = vsel %vm397, %v400, %v404
        %s407 = scalar_lea.vmem %s349, 16 [#allocation2]
        %v408 = vld [vmem:[%s407 + $0x1] sm:$0x7f]
        %s409 = scalar_lea.vmem %s356, 16 [#allocation3]
        %v410 = vld [vmem:[%s409] sm:$0x1]
        %v412 = vrot.slane %v410, 1
        %v414 = vsel %vm397, %v408, %v412
        %s415 = scalar_lea.vmem %s349, 24 [#allocation2]
        %v416 = vld [vmem:[%s415 + $0x1] sm:$0x7f]
        %s417 = scalar_lea.vmem %s356, 24 [#allocation3]
        %v418 = vld [vmem:[%s417] sm:$0x1]
        %v420 = vrot.slane %v418, 1
        %v422 = vsel %vm397, %v416, %v420
        %s423 = scalar_lea.vmem %s349, 32 [#allocation2]
        %v424 = vld [vmem:[%s423 + $0x1] sm:$0x7f]
        %s425 = scalar_lea.vmem %s356, 32 [#allocation3]
        %v426 = vld [vmem:[%s425] sm:$0x1]
        %v428 = vrot.slane %v426, 1
        %v430 = vsel %vm397, %v424, %v428
        %s431 = scalar_lea.vmem %s349, 40 [#allocation2]
        %v432 = vld [vmem:[%s431 + $0x1] sm:$0x7f]
        %s433 = scalar_lea.vmem %s356, 40 [#allocation3]
        %v434 = vld [vmem:[%s433] sm:$0x1]
        %v436 = vrot.slane %v434, 1
        %v438 = vsel %vm397, %v432, %v436
        %v439 = vld [vmem:[%s349] sm:$0xff]
        %v440 = vld [vmem:[%s415] sm:$0xff]
        %s441 = scalar_lea.vmem %s349, 48 [#allocation2]
        %v442 = vld [vmem:[%s441] sm:$0xff]
        %s443 = scalar_lea.vmem %s349, 72 [#allocation2]
        %v444 = vld [vmem:[%s443] sm:$0xff]
        %v445 = vld [vmem:[%s399] sm:$0xff]
        %v446 = vld [vmem:[%s423] sm:$0xff]
        %s447 = scalar_lea.vmem %s349, 56 [#allocation2]
        %v448 = vld [vmem:[%s447] sm:$0xff]
        %s449 = scalar_lea.vmem %s349, 80 [#allocation2]
        %v450 = vld [vmem:[%s449] sm:$0xff]
        %v451 = vld [vmem:[%s407] sm:$0xff]
        %v452 = vld [vmem:[%s431] sm:$0xff]
        %s453 = scalar_lea.vmem %s349, 64 [#allocation2]
        %v454 = vld [vmem:[%s453] sm:$0xff]
        %s455 = scalar_lea.vmem %s349, 88 [#allocation2]
        %v456 = vld [vmem:[%s455] sm:$0xff]
        %458 = vrot.lane.b32.xlu0 %v439, 127
        %v459 = vpop.permute.xlu0 %458
        %462 = vrot.lane.b32.xlu0 %v442, 127
        %v463 = vpop.permute.xlu0 %462
        %466 = vrot.lane.b32.xlu0 %v398, 127
        %v467 = vpop.permute.xlu0 %466
        %470 = vrot.lane.b32.xlu0 %v445, 127
        %v471 = vpop.permute.xlu0 %470
        %474 = vrot.lane.b32.xlu0 %v448, 127
        %v475 = vpop.permute.xlu0 %474
        %478 = vrot.lane.b32.xlu0 %v406, 127
        %v479 = vpop.permute.xlu0 %478
        %482 = vrot.lane.b32.xlu0 %v451, 127
        %v483 = vpop.permute.xlu0 %482
        %486 = vrot.lane.b32.xlu0 %v454, 127
        %v487 = vpop.permute.xlu0 %486
        %490 = vrot.lane.b32.xlu0 %v414, 127
        %v491 = vpop.permute.xlu0 %490
        %v493 = vpack.c.bf16 %v440, %v439
        %v494 = vpack.c.bf16 %v442, %v459
        %v495 = vpack.c.bf16 %v463, %v444
        %v496 = vpack.c.bf16 %v422, %v398
        %v497 = vpack.c.bf16 %v445, %v467
        %v498 = vpack.c.bf16 %v471, %v446
        %v499 = vpack.c.bf16 %v450, %v448
        %v500 = vpack.c.bf16 %v406, %v475
        %v501 = vpack.c.bf16 %v479, %v430
        %v502 = vpack.c.bf16 %v452, %v451
        %v503 = vpack.c.bf16 %v454, %v483
        %v504 = vpack.c.bf16 %v487, %v456
        %v505 = vpack.c.bf16 %v438, %v414
        %v506 = vpack.c.bf16 1.0, %v491
        %v507 = vld [vmem:[%s2] sm:$0xff]
        %v508 = vld [vmem:[%s2 + $0x8] sm:$0xff]
        %v509 = vld [vmem:[%s2 + $0x10] sm:$0xff]
        %v510 = vld [vmem:[%s2 + $0x18] sm:$0xff]
        %v511 = vld [vmem:[%s2 + $0x20] sm:$0xff]
        %v517 = vunpack.c.l.b16 %v507
        %v518 = vunpack.c.h.b16 %v507
        %v519 = vunpack.c.l.b16 %v508
        %v520 = vunpack.c.h.b16 %v508
        %v521 = vunpack.c.l.b16 %v509
        %v522 = vunpack.c.h.b16 %v509
        %v523 = vunpack.c.l.b16 %v510
        %v524 = vunpack.c.h.b16 %v510
        %v525 = vunpack.c.l.b16 %v511
        %v526 = vunpack.c.h.b16 %v511
        %v527 = vpack.c.b16 %v519, %v517
        %v528 = vpack.c.b16 %v520, %v518
        %v529 = vpack.c.b16 %v523, %v521
        %v530 = vpack.c.b16 %v524, %v522
        %v531 = vpack.c.b16 %v525, %v525
        %v532 = vpack.c.b16 %v526, %v526
        %vm536 = vcmask 785408
        %v538 = vsel %vm536, %v528, 0
        %v541 = vsel %vm536, %v530, 0
        %v544 = vsel %vm536, %v532, 0
        %546 = vmatpush.bf16.msra.mxu0 %v500
        %547 = vmatpush.bf16.msra.mxu0 %v499
        %548 = vmatpush.bf16.msra.mxu0 %v498
        %549 = vmatpush.bf16.msra.mxu0 %v497
        %550 = vmatpush.bf16.msra.mxu0 %v496
        %551 = vmatpush.bf16.msra.mxu0 %v495
        %552 = vmatpush.bf16.msra.mxu0 %v494
        %553 = vmatpush.bf16.msra.mxu0 %v493
        %554 = vmatmul.bf16.gmra.mxu0 %v527
        %v555 = vpop.f32.mrf.mxu0
        %v556 = vadd.f32 0.0, %v555
        %v557 = vpop.f32.mrf.mxu0
        %v558 = vadd.f32 0.0, %v557
        %559 = vmatmul.bf16.gmra.mxu0 %v529
        %v560 = vpop.f32.mrf.mxu0
        %v561 = vadd.f32 0.0, %v560
        %v562 = vpop.f32.mrf.mxu0
        %v563 = vadd.f32 0.0, %v562
        %564 = vmatmul.bf16.gmra.mxu0 %v531
        %v565 = vpop.f32.mrf.mxu0
        %v566 = vadd.f32 0.0, %v565
        %v567 = vpop.f32.mrf.mxu0
        %568 = vdwg.mxu0
        %569 = vmatpush.bf16.msra.mxu0 0
        %570 = vmatpush.bf16.msra.mxu0 0
        %571 = vmatpush.bf16.msra.mxu0 %v506
        %572 = vmatpush.bf16.msra.mxu0 %v505
        %573 = vmatpush.bf16.msra.mxu0 %v504
        %574 = vmatpush.bf16.msra.mxu0 %v503
        %575 = vmatpush.bf16.msra.mxu0 %v502
        %576 = vmatpush.bf16.msra.mxu0 %v501
        %577 = vmatmul.bf16.gmra.mxu0 %v538
        %v578 = vpop.f32.mrf.mxu0
        %v579 = vadd.f32 %v556, %v578
        %v580 = vpop.f32.mrf.mxu0
        %v581 = vadd.f32 %v558, %v580
        %582 = vmatmul.bf16.gmra.mxu0 %v541
        %v583 = vpop.f32.mrf.mxu0
        %v584 = vadd.f32 %v561, %v583
        %v585 = vpop.f32.mrf.mxu0
        %v586 = vadd.f32 %v563, %v585
        %587 = vmatmul.bf16.gmra.mxu0 %v544
        %v588 = vpop.f32.mrf.mxu0
        %v589 = vadd.f32 %v566, %v588
        %v590 = vpop.f32.mrf.mxu0
        %591 = vdwg.mxu0
        %vm592 = vcmp.ge.f32.partialorder %v579, 0.0
        %vm593 = vcmp.ge.f32.partialorder %v581, 0.0
        %vm594 = vcmp.ge.f32.partialorder %v584, 0.0
        %vm595 = vcmp.ge.f32.partialorder %v586, 0.0
        %vm596 = vcmp.ge.f32.partialorder %v589, 0.0
        %v597 = vstv %s391
        %v598 = vmul.f32 %v597, %v579
        %v599 = vmul.f32 %v597, %v581
        %v600 = vmul.f32 %v597, %v584
        %v601 = vmul.f32 %v597, %v586
        %v602 = vmul.f32 %v597, %v589
        %v603 = vsel %vm592, %v579, %v598
        %v604 = vsel %vm593, %v581, %v599
        %v605 = vsel %vm594, %v584, %v600
        %v606 = vsel %vm595, %v586, %v601
        %v607 = vsel %vm596, %v589, %v602
        %vm608 = vcmask 64512
        %609 = vst.msk [vmem:[%s388] sm:$0xff] %vm608, %v603
        %610 = vst.msk [vmem:[%s388 + $0x8] sm:$0xff] %vm608, %v604
        %611 = vst.msk [vmem:[%s388 + $0x10] sm:$0xff] %vm608, %v605
        %612 = vst.msk [vmem:[%s388 + $0x18] sm:$0xff] %vm608, %v606
        %613 = vst.msk [vmem:[%s388 + $0x20] sm:$0xff] %vm608, %v607
        %v614 = vld [vmem:[%s443] sm:$0xff]
        %v615 = vld [vmem:[%s441] sm:$0xff]
        %617 = vrot.lane.b32.xlu0 %v615, 127
        %v618 = vpop.permute.xlu0 %617
        %v620 = vmax.f32 %v614, %v618
        %v621 = vmax.f32 %v422, %v467
        %v622 = vmax.f32 %v620, %v621
        %s623 = sld [smem:[#allocation4]]
        %v624 = vstv %s623
        %v625 = vmul.f32 %v622, %v624
        %s626 = sld [smem:[#allocation4 + $0x3]]
        %v627 = vstv %s626
        %v628 = vadd.f32 %v625, %v627
        %vm629 = vcmp.ge.f32.partialorder %v628, 0.0
        %v630 = vmul.f32 %v597, %v628
        %v631 = vsel %vm629, %v628, %v630
        %s632 = scalar_lea.vmem %s388, 40 [#allocation7]
        %633 = vst.msk [vmem:[%s632] sm:$0xff] %vm608, %v631
        %v634 = vld [vmem:[%s449] sm:$0xff]
        %v635 = vld [vmem:[%s447] sm:$0xff]
        %637 = vrot.lane.b32.xlu0 %v635, 127
        %v638 = vpop.permute.xlu0 %637
        %v640 = vmax.f32 %v634, %v638
        %v641 = vmax.f32 %v430, %v479
        %v642 = vmax.f32 %v640, %v641
        %s643 = sld [smem:[#allocation4 + $0x1]]
        %v644 = vstv %s643
        %v645 = vmul.f32 %v642, %v644
        %s646 = sld [smem:[#allocation4 + $0x4]]
        %v647 = vstv %s646
        %v648 = vadd.f32 %v645, %v647
        %vm649 = vcmp.ge.f32.partialorder %v648, 0.0
        %v650 = vmul.f32 %v597, %v648
        %v651 = vsel %vm649, %v648, %v650
        %s652 = scalar_lea.vmem %s388, 48 [#allocation7]
        %653 = vst.msk [vmem:[%s652] sm:$0xff] %vm608, %v651
        %v654 = vld [vmem:[%s455] sm:$0xff]
        %v655 = vld [vmem:[%s453] sm:$0xff]
        %657 = vrot.lane.b32.xlu0 %v655, 127
        %v658 = vpop.permute.xlu0 %657
        %v660 = vmax.f32 %v654, %v658
        %v661 = vmax.f32 %v438, %v491
        %v662 = vmax.f32 %v660, %v661
        %s663 = sld [smem:[#allocation4 + $0x2]]
        %v664 = vstv %s663
        %v665 = vmul.f32 %v662, %v664
        %s666 = sld [smem:[#allocation4 + $0x5]]
        %v667 = vstv %s666
        %v668 = vadd.f32 %v665, %v667
        %vm669 = vcmp.ge.f32.partialorder %v668, 0.0
        %v670 = vmul.f32 %v597, %v668
        %v671 = vsel %vm669, %v668, %v670
        %s672 = scalar_lea.vmem %s388, 56 [#allocation7]
        %673 = vst.msk [vmem:[%s672] sm:$0xff] %vm608, %v671
        %s674 = sand.u32 %s141, 1
        %s675 = scalar_lea.sflag [#allocation5], %s674
        %s676 = sand.u32 %s141, 1
        %s677 = smul.addr %s676, 64
        %s678 = scalar_lea.vmem [#allocation7], %s677
        // Predicated region
        $region117: #{tpu_custom_call.1} parent=103 // pred_check
          %p679 = pneg %p151
        $region118: #{tpu_custom_call.1} parent=103 // pred_check_branch
          %681 = sbr.rel (%p679) target = $region120
        $region119: #{tpu_custom_call.1} parent=103 // pred_region
          %683 = vsyncadd %s675, 0
          %s684 = smul.addr %s23, 8
          %s685 = sadd.s32 %s24, %s684
          %s686 = smul.addr %s685, 8
          %s687 = scalar_lea.hbm %s4, %s686
          %s688 = sshll.u32 %s678, 4
          %s689 = int_to_ptr.vmem [resolvable:$true] %s688
          %s690 = sshll.u32 %s687, 4
          %s691 = int_to_ptr.hbm [resolvable:$true] %s690
          %696 = dma.vmem_to_hbm [thread:$0]  %s689, 1024, %s691, %s675, 128, 128, 8
        $region120: #{tpu_custom_call.1} parent=103 // pred_fallthru
          _
      $region104: #{tpu_custom_call.1} parent=5 // pred_fallthru
        _
      %p697 = scmp.le.s32.totalorder 2, %s14
      // Predicated region
      $region121: #{tpu_custom_call.1} parent=5 // pred_check
        %p698 = pneg %p697
      $region122: #{tpu_custom_call.1} parent=5 // pred_check_branch
        %700 = sbr.rel (%p698) target = $region124
      $region123: #{tpu_custom_call.1} parent=5 // pred_region
        %s701 = ssub.s32 %s14, 2
        // Predicated region
        $region125: #{tpu_custom_call.1} parent=123 // pred_check
          %p702 = pneg %p157
        $region126: #{tpu_custom_call.1} parent=123 // pred_check_branch
          %704 = sbr.rel (%p702) target = $region128
        $region127: #{tpu_custom_call.1} parent=123 // pred_region
          %s705 = sand.u32 %s142, 1
          %s706 = scalar_lea.sflag [#allocation5], %s705
          %s707 = sand.u32 %s142, 1
          %s708 = smul.addr %s707, 64
          %s709 = scalar_lea.vmem [#allocation7], %s708
          %711 = dma.done %s706, 1024
        $region128: #{tpu_custom_call.1} parent=123 // pred_fallthru
          _
      $region124: #{tpu_custom_call.1} parent=5 // pred_fallthru
        _
    $region6: #{tpu_custom_call.1} parent=1 // loop_footer
      %s18 = sadd.s32 1, %s14
    $region7: #{tpu_custom_call.1} parent=1 // loop_footer_branch
      %13 = sbr.rel target = $region3
    $region8: #{tpu_custom_call.1} parent=1 // loop_exit
      _
    %712 = vsyncpa [#allocation5], 1
    %s713 = scalar_lea.sflag [#allocation5], 1
    %714 = vsyncpa %s713, 1
    %715 = vsyncpa [#allocation6], 1
    %s716 = scalar_lea.sflag [#allocation6], 1
    %717 = vsyncpa %s716, 1

</llo_original>
